<compile_context>
chip_gen: v6e
topology: v6e:2x2x1
jax: 0.10.0
libtpu: 0.0.40
codegen_flags: <defaults>
</compile_context>

<pallas_src>
import jax
import jax.numpy as jnp
import numpy as np
from jax.experimental import pallas as pl
from jax.experimental.pallas import tpu as pltpu


# ----------------------------- model config ---------------------------------
IN_CHANNELS = 32          # "in_channels" of NoisePredictor
TIME_DIM = 16
MAX_T = 20
HID = (16, 8, 4)          # enc1 -> enc2 -> enc3 widths
LAYER_NAMES = ("enc1", "enc2", "enc3", "dec2", "dec3", "dec4", "out")
NUM_LAYERS = len(LAYER_NAMES)


# --------------------------- positional encoding ----------------------------
def make_pos_table(max_time_steps=MAX_T, embedding_size=TIME_DIM, n=10000.0):
    i = jnp.arange(embedding_size // 2, dtype=jnp.float32)
    k = jnp.arange(max_time_steps, dtype=jnp.float32)[:, None]
    angle = k / (n ** (2.0 * i / embedding_size))
    tab = jnp.zeros((max_time_steps, embedding_size), jnp.float32)
    tab = tab.at[:, 0::2].set(jnp.sin(angle))
    tab = tab.at[:, 1::2].set(jnp.cos(angle))
    return tab


# ------------------------------ param init ----------------------------------
def _linear_params(key, fan_in, fan_out):
    """PyTorch-style uniform(-1/sqrt(fan_in), 1/sqrt(fan_in)) init.
    Weight stored as (fan_in, fan_out) so the kernel does x @ W."""
    kw, kb = jax.random.split(key)
    bound = 1.0 / np.sqrt(fan_in)
    w = jax.random.uniform(kw, (fan_in, fan_out), jnp.float32, -bound, bound)
    b = jax.random.uniform(kb, (1, fan_out), jnp.float32, -bound, bound)
    return w, b


def init_params(key, in_channels=IN_CHANNELS, time_dim=TIME_DIM):
    keys = jax.random.split(key, 8)
    params = {}
    params["emb"] = _linear_params(keys[0], time_dim, in_channels)      # emb_layer[1]
    params["enc1"] = _linear_params(keys[1], in_channels, HID[0])
    params["enc2"] = _linear_params(keys[2], HID[0], HID[1])
    params["enc3"] = _linear_params(keys[3], HID[1], HID[2])
    params["dec2"] = _linear_params(keys[4], HID[2], HID[1])
    params["dec3"] = _linear_params(keys[5], HID[1], HID[0])
    params["dec4"] = _linear_params(keys[6], HID[0], in_channels)
    params["out"] = _linear_params(keys[7], in_channels, in_channels)
    return params


# ------------------------------ param packing --------------------------------
def _layer_dims(in_channels):
    c = in_channels
    return [(c, HID[0]), (HID[0], HID[1]), (HID[1], HID[2]),
            (HID[2], HID[1]), (HID[1], HID[0]), (HID[0], c), (c, c)]


def pack_mlp_params(params, in_channels):
    """Zero-pad every layer's (in, out) weight to (P, P) and stack into one slab.

    Padded rows/cols contribute exact zeros to the matmuls and the padded bias
    entries are zero, so the padded network computes identical values in the
    first `in_channels` output lanes."""
    P = max(in_channels, max(HID))
    w_packed = jnp.zeros((NUM_LAYERS, P, P), jnp.float32)
    b_packed = jnp.zeros((NUM_LAYERS, 1, P), jnp.float32)
    for l, name in enumerate(LAYER_NAMES):
        w, b = params[name]
        fi, fo = w.shape
        w_packed = w_packed.at[l, :fi, :fo].set(w)
        b_packed = b_packed.at[l, :, :fo].set(b)
    return w_packed, b_packed, P


# ------------------------------- Pallas kernel -------------------------------
def noise_predictor_kernel(x_ref, emb_ref, w_ref, b_ref, out_ref):
    """x_ref/emb_ref/out_ref: (bt, P).  w_ref: (7, P, P).  b_ref: (7, 1, P)."""

    def layer(h, l):
        # static layer index -> static VMEM views of the packed slabs
        return jnp.dot(h, w_ref[l], preferred_element_type=jnp.float32) + b_ref[l]

    h = x_ref[...] + emb_ref[...]                   # x + emb_layer(pos_enc(t))
    x1 = jnp.maximum(layer(h, 0), 0.0)              # enc1
    x2 = jnp.maximum(layer(x1, 1), 0.0)             # enc2
    x3 = jnp.maximum(layer(x2, 2), 0.0)             # enc3
    x4 = jnp.maximum(layer(x3, 3), 0.0) + x2        # dec2 + skip
    x5 = jnp.maximum(layer(x4, 4), 0.0) + x1        # dec3 + skip
    x6 = jnp.maximum(layer(x5, 5), 0.0)             # dec4
    out_ref[...] = layer(x6, 6).astype(out_ref.dtype)   # out


# --------------------------------- wrapper -----------------------------------
def noise_predictor_forward(x, t, params, pos_table, *, max_batch_tile=2048):
    """x: (B, in_channels) float32, t: (B,) int32 time-step indices."""
    B, C = x.shape

    # Fold the time-embedding branch (SiLU -> Linear) into a MAX_T-row lookup
    # table; the gather is index glue, not the hot path.
    we, be = params["emb"]
    emb_table = jax.nn.silu(pos_table) @ we + be        # (MAX_T, C)
    emb = emb_table[t]                                   # (B, C)

    w_packed, b_packed, P = pack_mlp_params(params, C)

    # Batch tile: as large as possible (amortizes per-grid-step overhead), but
    # capped so huge batches keep >=2 grid steps for v7x's two TensorCores.
    bt = min(B, max_batch_tile)
    bt = -(-bt // 8) * 8                  # sublane-align the tile
    Bp = -(-B // bt) * bt                 # pad batch to a tile multiple

    xp, embp = x, emb
    if P != C:
        xp = jnp.pad(xp, ((0, 0), (0, P - C)))
        embp = jnp.pad(embp, ((0, 0), (0, P - C)))
    if Bp != B:
        xp = jnp.pad(xp, ((0, Bp - B), (0, 0)))
        embp = jnp.pad(embp, ((0, Bp - B), (0, 0)))

    dims = _layer_dims(C)
    flops = 2 * Bp * sum(a * b for a, b in dims)
    bytes_accessed = 4 * (3 * Bp * P + int(w_packed.size) + int(b_packed.size))

    out = pl.pallas_call(
        noise_predictor_kernel,
        out_shape=jax.ShapeDtypeStruct((Bp, P), jnp.float32),
        grid_spec=pltpu.PrefetchScalarGridSpec(
            num_scalar_prefetch=0,
            grid=(Bp // bt,),
            in_specs=[
                pl.BlockSpec((bt, P), lambda i: (i, 0)),                # x tile
                pl.BlockSpec((bt, P), lambda i: (i, 0)),                # emb(t) tile
                pl.BlockSpec((NUM_LAYERS, P, P), lambda i: (0, 0, 0)),  # packed weights
                pl.BlockSpec((NUM_LAYERS, 1, P), lambda i: (0, 0, 0)),  # packed biases
            ],
            out_specs=pl.BlockSpec((bt, P), lambda i: (i, 0)),
        ),
        compiler_params=pltpu.CompilerParams(
            dimension_semantics=("parallel",),
        ),
        cost_estimate=pl.CostEstimate(
            flops=flops, transcendentals=0, bytes_accessed=bytes_accessed),
    )(xp, embp, w_packed, b_packed)

    return out[:B, :C]


# ------------------------------- pure-JAX ref --------------------------------
def noise_predictor_ref(x, t, params, pos_table):
    def lin(h, p):
        w, b = p
        return h @ w + b

    temb = pos_table[t]
    x = x + lin(temb * jax.nn.sigmoid(temb), params["emb"])
    x1 = jax.nn.relu(lin(x, params["enc1"]))
    x2 = jax.nn.relu(lin(x1, params["enc2"]))
    x3 = jax.nn.relu(lin(x2, params["enc3"]))
    x4 = jax.nn.relu(lin(x3, params["dec2"])) + x2
    x5 = jax.nn.relu(lin(x4, params["dec3"])) + x1
    x6 = jax.nn.relu(lin(x5, params["dec4"]))
    return lin(x6, params["out"])


# ----------------------------------- main ------------------------------------
if __name__ == "__main__":
    key = jax.random.PRNGKey(0)
    k_params, k_x, k_t = jax.random.split(key, 3)

    B = 20   # deliberately not a multiple of 8 to exercise the padding path
    params = init_params(k_params)
    pos_table = make_pos_table()

    x = jax.random.normal(k_x, (B, IN_CHANNELS), jnp.float32)
    t = jax.random.randint(k_t, (B,), 0, MAX_T, jnp.int32)

    out = noise_predictor_forward(x, t, params, pos_table)
    out = jax.block_until_ready(out)

    ref = jax.block_until_ready(noise_predictor_ref(x, t, params, pos_table))
    np.testing.assert_allclose(np.asarray(out), np.asarray(ref), rtol=1e-5, atol=1e-5)

    print("KERNEL_OK")
</pallas_src>

<mosaic_0001>
module attributes {stable_mosaic.version = 11 : i64} {
  func.func @noise_predictor_kernel(%arg0: i32, %arg1: memref<24x32xf32, #tpu.memory_space<vmem>>, %arg2: memref<24x32xf32, #tpu.memory_space<vmem>>, %arg3: memref<7x32x32xf32, #tpu.memory_space<vmem>>, %arg4: memref<7x1x32xf32, #tpu.memory_space<vmem>>, %arg5: memref<24x32xf32, #tpu.memory_space<vmem>>) attributes {dimension_semantics = [#tpu.dimension_semantics<parallel>], iteration_bounds = array<i64: 1>, scalar_prefetch = 0 : i64, scratch_operands = 0 : i64, tpu.core_type = #tpu.core_type<tc>, window_params = [{transform_indices = @transform_0, window_bounds = array<i64: 24, 32>}, {transform_indices = @transform_1, window_bounds = array<i64: 24, 32>}, {pipeline_mode = #tpu.pipeline_mode<synchronous>, transform_indices = @transform_2, window_bounds = array<i64: 7, 32, 32>}, {pipeline_mode = #tpu.pipeline_mode<synchronous>, transform_indices = @transform_3, window_bounds = array<i64: 7, 1, 32>}, {transform_indices = @transform_4, window_bounds = array<i64: 24, 32>}]} {
    %c0 = arith.constant 0 : index
    %c0_0 = arith.constant 0 : index
    %0 = vector.load %arg1[%c0, %c0_0] : memref<24x32xf32, #tpu.memory_space<vmem>>, vector<24x32xf32>
    %c0_1 = arith.constant 0 : index
    %c0_2 = arith.constant 0 : index
    %1 = vector.load %arg2[%c0_1, %c0_2] : memref<24x32xf32, #tpu.memory_space<vmem>>, vector<24x32xf32>
    %2 = arith.addf %0, %1 : vector<24x32xf32>
    %c0_3 = arith.constant 0 : index
    %c0_4 = arith.constant 0 : index
    %c0_5 = arith.constant 0 : index
    %3 = vector.load %arg3[%c0_3, %c0_4, %c0_5] : memref<7x32x32xf32, #tpu.memory_space<vmem>>, vector<1x32x32xf32>
    %4 = vector.shape_cast %3 : vector<1x32x32xf32> to vector<32x32xf32>
    %cst = arith.constant dense<0.000000e+00> : vector<24x32xf32>
    %5 = tpu.matmul %2, %4, %cst {dimension_numbers = #tpu.dot_dimension_numbers<[1], [0], [0], [1], [0, 0, 1, 1], [], []>} : vector<24x32xf32>, vector<32x32xf32>, vector<24x32xf32> -> vector<24x32xf32>
    %c0_6 = arith.constant 0 : index
    %c0_7 = arith.constant 0 : index
    %c0_8 = arith.constant 0 : index
    %6 = vector.load %arg4[%c0_6, %c0_7, %c0_8] : memref<7x1x32xf32, #tpu.memory_space<vmem>>, vector<1x1x32xf32>
    %7 = vector.shape_cast %6 : vector<1x1x32xf32> to vector<1x32xf32>
    %8 = vector.broadcast %7 : vector<1x32xf32> to vector<24x32xf32>
    %9 = arith.addf %5, %8 : vector<24x32xf32>
    %cst_9 = arith.constant 0.000000e+00 : f32
    %10 = vector.broadcast %cst_9 : f32 to vector<24x32xf32>
    %11 = arith.maximumf %9, %10 : vector<24x32xf32>
    %c1 = arith.constant 1 : index
    %c0_10 = arith.constant 0 : index
    %c0_11 = arith.constant 0 : index
    %12 = vector.load %arg3[%c1, %c0_10, %c0_11] : memref<7x32x32xf32, #tpu.memory_space<vmem>>, vector<1x32x32xf32>
    %13 = vector.shape_cast %12 : vector<1x32x32xf32> to vector<32x32xf32>
    %cst_12 = arith.constant dense<0.000000e+00> : vector<24x32xf32>
    %14 = tpu.matmul %11, %13, %cst_12 {dimension_numbers = #tpu.dot_dimension_numbers<[1], [0], [0], [1], [0, 0, 1, 1], [], []>} : vector<24x32xf32>, vector<32x32xf32>, vector<24x32xf32> -> vector<24x32xf32>
    %c1_13 = arith.constant 1 : index
    %c0_14 = arith.constant 0 : index
    %c0_15 = arith.constant 0 : index
    %15 = vector.load %arg4[%c1_13, %c0_14, %c0_15] : memref<7x1x32xf32, #tpu.memory_space<vmem>>, vector<1x1x32xf32>
    %16 = vector.shape_cast %15 : vector<1x1x32xf32> to vector<1x32xf32>
    %17 = vector.broadcast %16 : vector<1x32xf32> to vector<24x32xf32>
    %18 = arith.addf %14, %17 : vector<24x32xf32>
    %cst_16 = arith.constant 0.000000e+00 : f32
    %19 = vector.broadcast %cst_16 : f32 to vector<24x32xf32>
    %20 = arith.maximumf %18, %19 : vector<24x32xf32>
    %c2 = arith.constant 2 : index
    %c0_17 = arith.constant 0 : index
    %c0_18 = arith.constant 0 : index
    %21 = vector.load %arg3[%c2, %c0_17, %c0_18] : memref<7x32x32xf32, #tpu.memory_space<vmem>>, vector<1x32x32xf32>
    %22 = vector.shape_cast %21 : vector<1x32x32xf32> to vector<32x32xf32>
    %cst_19 = arith.constant dense<0.000000e+00> : vector<24x32xf32>
    %23 = tpu.matmul %20, %22, %cst_19 {dimension_numbers = #tpu.dot_dimension_numbers<[1], [0], [0], [1], [0, 0, 1, 1], [], []>} : vector<24x32xf32>, vector<32x32xf32>, vector<24x32xf32> -> vector<24x32xf32>
    %c2_20 = arith.constant 2 : index
    %c0_21 = arith.constant 0 : index
    %c0_22 = arith.constant 0 : index
    %24 = vector.load %arg4[%c2_20, %c0_21, %c0_22] : memref<7x1x32xf32, #tpu.memory_space<vmem>>, vector<1x1x32xf32>
    %25 = vector.shape_cast %24 : vector<1x1x32xf32> to vector<1x32xf32>
    %26 = vector.broadcast %25 : vector<1x32xf32> to vector<24x32xf32>
    %27 = arith.addf %23, %26 : vector<24x32xf32>
    %cst_23 = arith.constant 0.000000e+00 : f32
    %28 = vector.broadcast %cst_23 : f32 to vector<24x32xf32>
    %29 = arith.maximumf %27, %28 : vector<24x32xf32>
    %c3 = arith.constant 3 : index
    %c0_24 = arith.constant 0 : index
    %c0_25 = arith.constant 0 : index
    %30 = vector.load %arg3[%c3, %c0_24, %c0_25] : memref<7x32x32xf32, #tpu.memory_space<vmem>>, vector<1x32x32xf32>
    %31 = vector.shape_cast %30 : vector<1x32x32xf32> to vector<32x32xf32>
    %cst_26 = arith.constant dense<0.000000e+00> : vector<24x32xf32>
    %32 = tpu.matmul %29, %31, %cst_26 {dimension_numbers = #tpu.dot_dimension_numbers<[1], [0], [0], [1], [0, 0, 1, 1], [], []>} : vector<24x32xf32>, vector<32x32xf32>, vector<24x32xf32> -> vector<24x32xf32>
    %c3_27 = arith.constant 3 : index
    %c0_28 = arith.constant 0 : index
    %c0_29 = arith.constant 0 : index
    %33 = vector.load %arg4[%c3_27, %c0_28, %c0_29] : memref<7x1x32xf32, #tpu.memory_space<vmem>>, vector<1x1x32xf32>
    %34 = vector.shape_cast %33 : vector<1x1x32xf32> to vector<1x32xf32>
    %35 = vector.broadcast %34 : vector<1x32xf32> to vector<24x32xf32>
    %36 = arith.addf %32, %35 : vector<24x32xf32>
    %cst_30 = arith.constant 0.000000e+00 : f32
    %37 = vector.broadcast %cst_30 : f32 to vector<24x32xf32>
    %38 = arith.maximumf %36, %37 : vector<24x32xf32>
    %39 = arith.addf %38, %20 : vector<24x32xf32>
    %c4 = arith.constant 4 : index
    %c0_31 = arith.constant 0 : index
    %c0_32 = arith.constant 0 : index
    %40 = vector.load %arg3[%c4, %c0_31, %c0_32] : memref<7x32x32xf32, #tpu.memory_space<vmem>>, vector<1x32x32xf32>
    %41 = vector.shape_cast %40 : vector<1x32x32xf32> to vector<32x32xf32>
    %cst_33 = arith.constant dense<0.000000e+00> : vector<24x32xf32>
    %42 = tpu.matmul %39, %41, %cst_33 {dimension_numbers = #tpu.dot_dimension_numbers<[1], [0], [0], [1], [0, 0, 1, 1], [], []>} : vector<24x32xf32>, vector<32x32xf32>, vector<24x32xf32> -> vector<24x32xf32>
    %c4_34 = arith.constant 4 : index
    %c0_35 = arith.constant 0 : index
    %c0_36 = arith.constant 0 : index
    %43 = vector.load %arg4[%c4_34, %c0_35, %c0_36] : memref<7x1x32xf32, #tpu.memory_space<vmem>>, vector<1x1x32xf32>
    %44 = vector.shape_cast %43 : vector<1x1x32xf32> to vector<1x32xf32>
    %45 = vector.broadcast %44 : vector<1x32xf32> to vector<24x32xf32>
    %46 = arith.addf %42, %45 : vector<24x32xf32>
    %cst_37 = arith.constant 0.000000e+00 : f32
    %47 = vector.broadcast %cst_37 : f32 to vector<24x32xf32>
    %48 = arith.maximumf %46, %47 : vector<24x32xf32>
    %49 = arith.addf %48, %11 : vector<24x32xf32>
    %c5 = arith.constant 5 : index
    %c0_38 = arith.constant 0 : index
    %c0_39 = arith.constant 0 : index
    %50 = vector.load %arg3[%c5, %c0_38, %c0_39] : memref<7x32x32xf32, #tpu.memory_space<vmem>>, vector<1x32x32xf32>
    %51 = vector.shape_cast %50 : vector<1x32x32xf32> to vector<32x32xf32>
    %cst_40 = arith.constant dense<0.000000e+00> : vector<24x32xf32>
    %52 = tpu.matmul %49, %51, %cst_40 {dimension_numbers = #tpu.dot_dimension_numbers<[1], [0], [0], [1], [0, 0, 1, 1], [], []>} : vector<24x32xf32>, vector<32x32xf32>, vector<24x32xf32> -> vector<24x32xf32>
    %c5_41 = arith.constant 5 : index
    %c0_42 = arith.constant 0 : index
    %c0_43 = arith.constant 0 : index
    %53 = vector.load %arg4[%c5_41, %c0_42, %c0_43] : memref<7x1x32xf32, #tpu.memory_space<vmem>>, vector<1x1x32xf32>
    %54 = vector.shape_cast %53 : vector<1x1x32xf32> to vector<1x32xf32>
    %55 = vector.broadcast %54 : vector<1x32xf32> to vector<24x32xf32>
    %56 = arith.addf %52, %55 : vector<24x32xf32>
    %cst_44 = arith.constant 0.000000e+00 : f32
    %57 = vector.broadcast %cst_44 : f32 to vector<24x32xf32>
    %58 = arith.maximumf %56, %57 : vector<24x32xf32>
    %c6 = arith.constant 6 : index
    %c0_45 = arith.constant 0 : index
    %c0_46 = arith.constant 0 : index
    %59 = vector.load %arg3[%c6, %c0_45, %c0_46] : memref<7x32x32xf32, #tpu.memory_space<vmem>>, vector<1x32x32xf32>
    %60 = vector.shape_cast %59 : vector<1x32x32xf32> to vector<32x32xf32>
    %cst_47 = arith.constant dense<0.000000e+00> : vector<24x32xf32>
    %61 = tpu.matmul %58, %60, %cst_47 {dimension_numbers = #tpu.dot_dimension_numbers<[1], [0], [0], [1], [0, 0, 1, 1], [], []>} : vector<24x32xf32>, vector<32x32xf32>, vector<24x32xf32> -> vector<24x32xf32>
    %c6_48 = arith.constant 6 : index
    %c0_49 = arith.constant 0 : index
    %c0_50 = arith.constant 0 : index
    %62 = vector.load %arg4[%c6_48, %c0_49, %c0_50] : memref<7x1x32xf32, #tpu.memory_space<vmem>>, vector<1x1x32xf32>
    %63 = vector.shape_cast %62 : vector<1x1x32xf32> to vector<1x32xf32>
    %64 = vector.broadcast %63 : vector<1x32xf32> to vector<24x32xf32>
    %65 = arith.addf %61, %64 : vector<24x32xf32>
    %c0_51 = arith.constant 0 : index
    %c0_52 = arith.constant 0 : index
    %66 = vector.load %arg5[%c0_51, %c0_52] : memref<24x32xf32, #tpu.memory_space<vmem>>, vector<24x32xf32>
    tpu.vector_store %arg5[%c0_51, %c0_52], %65 {strides = array<i32>} : memref<24x32xf32, #tpu.memory_space<vmem>>, vector<24x32xf32>,
    return
  }
  func.func @transform_0(%arg0: i32) -> (i32, i32) {
    %c0_i32 = arith.constant 0 : i32
    %c0_i32_0 = arith.constant 0 : i32
    return %arg0, %c0_i32 : i32, i32
  }
  func.func @transform_1(%arg0: i32) -> (i32, i32) {
    %c0_i32 = arith.constant 0 : i32
    %c0_i32_0 = arith.constant 0 : i32
    return %arg0, %c0_i32 : i32, i32
  }
  func.func @transform_2(%arg0: i32) -> (i32, i32, i32) {
    %c0_i32 = arith.constant 0 : i32
    %c0_i32_0 = arith.constant 0 : i32
    %c0_i32_1 = arith.constant 0 : i32
    %c0_i32_2 = arith.constant 0 : i32
    return %c0_i32, %c0_i32_0, %c0_i32_1 : i32, i32, i32
  }
  func.func @transform_3(%arg0: i32) -> (i32, i32, i32) {
    %c0_i32 = arith.constant 0 : i32
    %c0_i32_0 = arith.constant 0 : i32
    %c0_i32_1 = arith.constant 0 : i32
    %c0_i32_2 = arith.constant 0 : i32
    return %c0_i32, %c0_i32_0, %c0_i32_1 : i32, i32, i32
  }
  func.func @transform_4(%arg0: i32) -> (i32, i32) {
    %c0_i32 = arith.constant 0 : i32
    %c0_i32_0 = arith.constant 0 : i32
    return %arg0, %c0_i32 : i32, i32
  }
}

</mosaic_0001>

<llo_original>
// kernel: tpu_custom_call.1
$region0: #{tpu_custom_call.1}
  #allocation0 [shape = 'u32[]', space=smem, size = 0x4, offset = 0x4, fixed_abs, tag = 'smem constant byte address 0x4 - core index']
  #allocation1 [shape = 'u32[144,128]{1,0:T(1,128)}', space=vmem, size = 0x12000, scoped, tag = 'internal scratch']
  %s0 = inlined_call_operand.hbm [shape: f32[24,32], index: 0, kind: input, shape index: {}]
  %s1 = inlined_call_operand.hbm [shape: f32[24,32], index: 1, kind: input, shape index: {}]
  %s2 = inlined_call_operand.hbm [shape: f32[7,32,32], index: 2, kind: input, shape index: {}]
  %s3 = inlined_call_operand.hbm [shape: f32[7,1,32], index: 3, kind: input, shape index: {}]
  %s4 = inlined_call_operand.hbm [shape: f32[24,32], index: 4, kind: output, shape index: {}]
  %s5 = sld [smem:[#allocation0]]
  $region42: #{tpu_custom_call.1} parent=0
    _
  %s7 = ssub.s32 1, %s5
  %s8 = scalar_select 0, %s7, %s5
  $region1: #{tpu_custom_call.1} parent=0
    #allocation2 [shape = 'u8[12288]{0}', space=vmem, size = 0x3000, scoped, tag = 'input window, operand 0, single buffered']
    #allocation3 [shape = 's32[1]{0}', space=sflag, size = 0x4, scoped, tag = 'scoped memory for tpu_custom_call.1']
    #allocation4 [shape = 's32[1]{0}', space=sflag, size = 0x4, scoped, tag = 'scoped memory for tpu_custom_call.1']
    #allocation5 [shape = 'u8[12288]{0}', space=vmem, size = 0x3000, scoped, tag = 'input window, operand 1, single buffered']
    #allocation6 [shape = 's32[1]{0}', space=sflag, size = 0x4, scoped, tag = 'scoped memory for tpu_custom_call.1']
    #allocation7 [shape = 'u8[114688]{0}', space=vmem, size = 0x1c000, scoped, tag = 'input window, operand 2, single buffered']
    #allocation8 [shape = 'u8[3584]{0}', space=vmem, size = 0x1000, scoped, tag = 'input window, operand 3, single buffered']
    #allocation9 [shape = 's32[1]{0}', space=sflag, size = 0x4, scoped, tag = 'scoped memory for tpu_custom_call.1']
    #allocation10 [shape = 'u8[12288]{0}', space=vmem, size = 0x3000, scoped, tag = 'output window, operand 0, single buffered']
    %9 = vsyncpa [#allocation3], 0
    %10 = vsyncpa [#allocation6], 0
    %11 = vsyncpa [#allocation9], 0
    %12 = vsyncpa [#allocation4], 0
    // Predicated region
    $region2: #{tpu_custom_call.1} parent=1 // pred_check
      _
    $region3: #{tpu_custom_call.1} parent=1 // pred_check_branch
      %14 = sbr.rel (0) target = $region5
    $region4: #{tpu_custom_call.1} parent=1 // pred_region
      %s16 = ssub.s32 384, 384
      %17 = vsyncadd [#allocation3], %s16
      %s18 = sshll.u32 [#allocation2], 4
      %s19 = int_to_ptr.vmem [resolvable:$true] %s18
      %24 = dma.hbm_to_vmem [thread:$0]  %s0, 384, %s19, [#allocation3], 128, 128, 8
    $region5: #{tpu_custom_call.1} parent=1 // pred_fallthru
      _
    // Predicated region
    $region6: #{tpu_custom_call.1} parent=1 // pred_check
      _
    $region7: #{tpu_custom_call.1} parent=1 // pred_check_branch
      %26 = sbr.rel (0) target = $region9
    $region8: #{tpu_custom_call.1} parent=1 // pred_region
      %s28 = ssub.s32 384, 384
      %29 = vsyncadd [#allocation6], %s28
      %s30 = sshll.u32 [#allocation5], 4
      %s31 = int_to_ptr.vmem [resolvable:$true] %s30
      %36 = dma.hbm_to_vmem [thread:$0]  %s1, 384, %s31, [#allocation6], 128, 128, 8
    $region9: #{tpu_custom_call.1} parent=1 // pred_fallthru
      _
    // Predicated region
    $region10: #{tpu_custom_call.1} parent=1 // pred_check
      _
    $region11: #{tpu_custom_call.1} parent=1 // pred_check_branch
      %38 = sbr.rel (0) target = $region13
    $region12: #{tpu_custom_call.1} parent=1 // pred_region
      %s40 = ssub.s32 3584, 3584
      %41 = vsyncadd [#allocation6], %s40
      %s42 = sshll.u32 [#allocation7], 4
      %s43 = int_to_ptr.vmem [resolvable:$true] %s42
      %48 = dma.hbm_to_vmem [thread:$0]  %s2, 3584, %s43, [#allocation6], 128, 128, 8
    $region13: #{tpu_custom_call.1} parent=1 // pred_fallthru
      _
    // Predicated region
    $region14: #{tpu_custom_call.1} parent=1 // pred_check
      _
    $region15: #{tpu_custom_call.1} parent=1 // pred_check_branch
      %50 = sbr.rel (0) target = $region17
    $region16: #{tpu_custom_call.1} parent=1 // pred_region
      %s52 = ssub.s32 112, 112
      %53 = vsyncadd [#allocation9], %s52
      %s54 = sshll.u32 [#allocation8], 4
      %s55 = int_to_ptr.vmem [resolvable:$true] %s54
      %60 = dma.hbm_to_vmem [thread:$0]  %s3, 112, %s55, [#allocation9], 16, 16, 1
    $region17: #{tpu_custom_call.1} parent=1 // pred_fallthru
      _
    // Predicated region
    $region18: #{tpu_custom_call.1} parent=1 // pred_check
      _
    $region19: #{tpu_custom_call.1} parent=1 // pred_check_branch
      %62 = sbr.rel (0) target = $region21
    $region20: #{tpu_custom_call.1} parent=1 // pred_region
      %63 = dma.done [#allocation3], 384
    $region21: #{tpu_custom_call.1} parent=1 // pred_fallthru
      _
    // Predicated region
    $region22: #{tpu_custom_call.1} parent=1 // pred_check
      _
    $region23: #{tpu_custom_call.1} parent=1 // pred_check_branch
      %65 = sbr.rel (0) target = $region25
    $region24: #{tpu_custom_call.1} parent=1 // pred_region
      %66 = dma.done [#allocation6], 384
    $region25: #{tpu_custom_call.1} parent=1 // pred_fallthru
      _
    // Predicated region
    $region26: #{tpu_custom_call.1} parent=1 // pred_check
      _
    $region27: #{tpu_custom_call.1} parent=1 // pred_check_branch
      %68 = sbr.rel (0) target = $region29
    $region28: #{tpu_custom_call.1} parent=1 // pred_region
      %69 = dma.done [#allocation6], 3584
    $region29: #{tpu_custom_call.1} parent=1 // pred_fallthru
      _
    // Predicated region
    $region30: #{tpu_custom_call.1} parent=1 // pred_check
      _
    $region31: #{tpu_custom_call.1} parent=1 // pred_check_branch
      %71 = sbr.rel (0) target = $region33
    $region32: #{tpu_custom_call.1} parent=1 // pred_region
      %72 = dma.done [#allocation9], 112
    $region33: #{tpu_custom_call.1} parent=1 // pred_fallthru
      _
    %v73 = vld [vmem:[#allocation2] sm:$0xff]
    %v74 = vld [vmem:[#allocation2 + $0x8] sm:$0xff]
    %v75 = vld [vmem:[#allocation2 + $0x10] sm:$0xff]
    %v76 = vld [vmem:[#allocation5] sm:$0xff]
    %v77 = vld [vmem:[#allocation5 + $0x8] sm:$0xff]
    %v78 = vld [vmem:[#allocation5 + $0x10] sm:$0xff]
    %v79 = vadd.f32 %v73, %v76
    %v80 = vadd.f32 %v74, %v77
    %v81 = vadd.f32 %v75, %v78
    %v82 = vld [vmem:[#allocation7] sm:$0xff]
    %v83 = vld [vmem:[#allocation7 + $0x8] sm:$0xff]
    %v84 = vld [vmem:[#allocation7 + $0x10] sm:$0xff]
    %v85 = vld [vmem:[#allocation7 + $0x18] sm:$0xff]
    %v86 = vld [vmem:[#allocation8] sm:$0x1]
    %v88 = vlaneseq
    %v89 = vshrl.u32 %v88, 7
    %v90 = vsub.s32 0, %v89
    %v91 = vrot.slane %v86, %v90
    %vm93 = vcmask 261120
    %v95 = vsel %vm93, %v79, 0
    %v98 = vsel %vm93, %v80, 0
    %v101 = vsel %vm93, %v81, 0
    %103 = vmatprep.subr.mxu0 0.0
    %104 = vmatpush1.msra.mxu0 0.0
    %105 = vmatprep.subr.mxu0 0.0
    %106 = vmatpush1.msra.mxu0 0.0
    %107 = vmatprep.subr.mxu0 0.0
    %108 = vmatpush1.msra.mxu0 0.0
    %109 = vmatprep.subr.mxu0 0.0
    %110 = vmatpush1.msra.mxu0 0.0
    %111 = vmatprep.subr.mxu0 0.0
    %112 = vmatpush1.msra.mxu0 0.0
    %113 = vmatprep.subr.mxu0 0.0
    %114 = vmatpush1.msra.mxu0 0.0
    %115 = vmatprep.subr.mxu0 0.0
    %116 = vmatpush1.msra.mxu0 0.0
    %117 = vmatprep.subr.mxu0 0.0
    %118 = vmatpush1.msra.mxu0 0.0
    %119 = vmatprep.subr.mxu0 0.0
    %120 = vmatpush1.msra.mxu0 0.0
    %121 = vmatprep.subr.mxu0 0.0
    %122 = vmatpush1.msra.mxu0 0.0
    %123 = vmatprep.subr.mxu0 0.0
    %124 = vmatpush1.msra.mxu0 0.0
    %125 = vmatprep.subr.mxu0 0.0
    %126 = vmatpush1.msra.mxu0 0.0
    %127 = vmatprep.subr.mxu0 0.0
    %128 = vmatpush1.msra.mxu0 %v85
    %129 = vmatprep.subr.mxu0 0.0
    %130 = vmatpush1.msra.mxu0 %v84
    %131 = vmatprep.subr.mxu0 0.0
    %132 = vmatpush1.msra.mxu0 %v83
    %133 = vmatprep.subr.mxu0 0.0
    %134 = vmatpush1.msra.mxu0 %v82
    %135 = vmatprep.subr.mxu0 0.0
    %136 = vmatpush2.msra.mxu0 0.0
    %137 = vmatprep.subr.mxu0 0.0
    %138 = vmatpush2.msra.mxu0 0.0
    %139 = vmatprep.subr.mxu0 0.0
    %140 = vmatpush2.msra.mxu0 0.0
    %141 = vmatprep.subr.mxu0 0.0
    %142 = vmatpush2.msra.mxu0 0.0
    %143 = vmatprep.subr.mxu0 0.0
    %144 = vmatpush2.msra.mxu0 0.0
    %145 = vmatprep.subr.mxu0 0.0
    %146 = vmatpush2.msra.mxu0 0.0
    %147 = vmatprep.subr.mxu0 0.0
    %148 = vmatpush2.msra.mxu0 0.0
    %149 = vmatprep.subr.mxu0 0.0
    %150 = vmatpush2.msra.mxu0 0.0
    %151 = vmatprep.subr.mxu0 0.0
    %152 = vmatpush2.msra.mxu0 0.0
    %153 = vmatprep.subr.mxu0 0.0
    %154 = vmatpush2.msra.mxu0 0.0
    %155 = vmatprep.subr.mxu0 0.0
    %156 = vmatpush2.msra.mxu0 0.0
    %157 = vmatprep.subr.mxu0 0.0
    %158 = vmatpush2.msra.mxu0 0.0
    %159 = vmatprep.subr.mxu0 0.0
    %160 = vmatpush2.msra.mxu0 0.0
    %161 = vmatprep.subr.mxu0 0.0
    %162 = vmatpush2.msra.mxu0 0.0
    %163 = vmatprep.subr.mxu0 0.0
    %164 = vmatpush2.msra.mxu0 0.0
    %165 = vmatprep.subr.mxu0 0.0
    %166 = vmatpush2.msra.mxu0 0.0
    %167 = vmatprep.mubr.f32.mxu0 0.0
    %168 = vmatmul.mubr.f32.gmra.mxu0 %v95
    %v169 = vpop.f32.mrf.mxu0
    %v170 = vadd.f32 %v91, %v169
    %v171 = vpop.f32.mrf.mxu0
    %172 = vmatprep.mubr.f32.mxu0 0.0
    %173 = vmatmul.mubr.f32.gmra.mxu0 %v98
    %v174 = vpop.f32.mrf.mxu0
    %v175 = vadd.f32 %v91, %v174
    %v176 = vpop.f32.mrf.mxu0
    %177 = vmatprep.mubr.f32.mxu0 0.0
    %178 = vmatmul.mubr.f32.gmra.mxu0 %v101
    %v179 = vpop.f32.mrf.mxu0
    %v180 = vadd.f32 %v91, %v179
    %v181 = vpop.f32.mrf.mxu0
    %182 = vdwg.mxu0
    %v183 = vmax.f32 %v170, 0.0
    %v184 = vmax.f32 %v175, 0.0
    %v185 = vmax.f32 %v180, 0.0
    %s186 = scalar_lea.vmem [#allocation7], 32
    %v187 = vld [vmem:[%s186] sm:$0xff]
    %v188 = vld [vmem:[%s186 + $0x8] sm:$0xff]
    %v189 = vld [vmem:[%s186 + $0x10] sm:$0xff]
    %v190 = vld [vmem:[%s186 + $0x18] sm:$0xff]
    %s191 = scalar_lea.vmem [#allocation8], 1
    %v192 = vld [vmem:[%s191] sm:$0x1]
    %v194 = vlaneseq
    %v195 = vshrl.u32 %v194, 7
    %v196 = vsub.s32 0, %v195
    %v197 = vrot.slane %v192, %v196
    %v200 = vsel %vm93, %v183, 0
    %v203 = vsel %vm93, %v184, 0
    %v206 = vsel %vm93, %v185, 0
    %208 = vmatprep.subr.mxu0 0.0
    %209 = vmatpush1.msra.mxu0 0.0
    %210 = vmatprep.subr.mxu0 0.0
    %211 = vmatpush1.msra.mxu0 0.0
    %212 = vmatprep.subr.mxu0 0.0
    %213 = vmatpush1.msra.mxu0 0.0
    %214 = vmatprep.subr.mxu0 0.0
    %215 = vmatpush1.msra.mxu0 0.0
    %216 = vmatprep.subr.mxu0 0.0
    %217 = vmatpush1.msra.mxu0 0.0
    %218 = vmatprep.subr.mxu0 0.0
    %219 = vmatpush1.msra.mxu0 0.0
    %220 = vmatprep.subr.mxu0 0.0
    %221 = vmatpush1.msra.mxu0 0.0
    %222 = vmatprep.subr.mxu0 0.0
    %223 = vmatpush1.msra.mxu0 0.0
    %224 = vmatprep.subr.mxu0 0.0
    %225 = vmatpush1.msra.mxu0 0.0
    %226 = vmatprep.subr.mxu0 0.0
    %227 = vmatpush1.msra.mxu0 0.0
    %228 = vmatprep.subr.mxu0 0.0
    %229 = vmatpush1.msra.mxu0 0.0
    %230 = vmatprep.subr.mxu0 0.0
    %231 = vmatpush1.msra.mxu0 0.0
    %232 = vmatprep.subr.mxu0 0.0
    %233 = vmatpush1.msra.mxu0 %v190
    %234 = vmatprep.subr.mxu0 0.0
    %235 = vmatpush1.msra.mxu0 %v189
    %236 = vmatprep.subr.mxu0 0.0
    %237 = vmatpush1.msra.mxu0 %v188
    %238 = vmatprep.subr.mxu0 0.0
    %239 = vmatpush1.msra.mxu0 %v187
    %240 = vmatprep.subr.mxu0 0.0
    %241 = vmatpush2.msra.mxu0 0.0
    %242 = vmatprep.subr.mxu0 0.0
    %243 = vmatpush2.msra.mxu0 0.0
    %244 = vmatprep.subr.mxu0 0.0
    %245 = vmatpush2.msra.mxu0 0.0
    %246 = vmatprep.subr.mxu0 0.0
    %247 = vmatpush2.msra.mxu0 0.0
    %248 = vmatprep.subr.mxu0 0.0
    %249 = vmatpush2.msra.mxu0 0.0
    %250 = vmatprep.subr.mxu0 0.0
    %251 = vmatpush2.msra.mxu0 0.0
    %252 = vmatprep.subr.mxu0 0.0
    %253 = vmatpush2.msra.mxu0 0.0
    %254 = vmatprep.subr.mxu0 0.0
    %255 = vmatpush2.msra.mxu0 0.0
    %256 = vmatprep.subr.mxu0 0.0
    %257 = vmatpush2.msra.mxu0 0.0
    %258 = vmatprep.subr.mxu0 0.0
    %259 = vmatpush2.msra.mxu0 0.0
    %260 = vmatprep.subr.mxu0 0.0
    %261 = vmatpush2.msra.mxu0 0.0
    %262 = vmatprep.subr.mxu0 0.0
    %263 = vmatpush2.msra.mxu0 0.0
    %264 = vmatprep.subr.mxu0 0.0
    %265 = vmatpush2.msra.mxu0 0.0
    %266 = vmatprep.subr.mxu0 0.0
    %267 = vmatpush2.msra.mxu0 0.0
    %268 = vmatprep.subr.mxu0 0.0
    %269 = vmatpush2.msra.mxu0 0.0
    %270 = vmatprep.subr.mxu0 0.0
    %271 = vmatpush2.msra.mxu0 0.0
    %272 = vmatprep.mubr.f32.mxu0 0.0
    %273 = vmatmul.mubr.f32.gmra.mxu0 %v200
    %v274 = vpop.f32.mrf.mxu0
    %v275 = vadd.f32 %v197, %v274
    %v276 = vpop.f32.mrf.mxu0
    %277 = vmatprep.mubr.f32.mxu0 0.0
    %278 = vmatmul.mubr.f32.gmra.mxu0 %v203
    %v279 = vpop.f32.mrf.mxu0
    %v280 = vadd.f32 %v197, %v279
    %v281 = vpop.f32.mrf.mxu0
    %282 = vmatprep.mubr.f32.mxu0 0.0
    %283 = vmatmul.mubr.f32.gmra.mxu0 %v206
    %v284 = vpop.f32.mrf.mxu0
    %v285 = vadd.f32 %v197, %v284
    %v286 = vpop.f32.mrf.mxu0
    %287 = vdwg.mxu0
    %v288 = vmax.f32 %v275, 0.0
    %v289 = vmax.f32 %v280, 0.0
    %v290 = vmax.f32 %v285, 0.0
    %s291 = scalar_lea.vmem [#allocation7], 64
    %v292 = vld [vmem:[%s291] sm:$0xff]
    %v293 = vld [vmem:[%s291 + $0x8] sm:$0xff]
    %v294 = vld [vmem:[%s291 + $0x10] sm:$0xff]
    %v295 = vld [vmem:[%s291 + $0x18] sm:$0xff]
    %s296 = scalar_lea.vmem [#allocation8], 2
    %v297 = vld [vmem:[%s296] sm:$0x1]
    %v299 = vlaneseq
    %v300 = vshrl.u32 %v299, 7
    %v301 = vsub.s32 0, %v300
    %v302 = vrot.slane %v297, %v301
    %v305 = vsel %vm93, %v288, 0
    %v308 = vsel %vm93, %v289, 0
    %v311 = vsel %vm93, %v290, 0
    %313 = vmatprep.subr.mxu0 0.0
    %314 = vmatpush1.msra.mxu0 0.0
    %315 = vmatprep.subr.mxu0 0.0
    %316 = vmatpush1.msra.mxu0 0.0
    %317 = vmatprep.subr.mxu0 0.0
    %318 = vmatpush1.msra.mxu0 0.0
    %319 = vmatprep.subr.mxu0 0.0
    %320 = vmatpush1.msra.mxu0 0.0
    %321 = vmatprep.subr.mxu0 0.0
    %322 = vmatpush1.msra.mxu0 0.0
    %323 = vmatprep.subr.mxu0 0.0
    %324 = vmatpush1.msra.mxu0 0.0
    %325 = vmatprep.subr.mxu0 0.0
    %326 = vmatpush1.msra.mxu0 0.0
    %327 = vmatprep.subr.mxu0 0.0
    %328 = vmatpush1.msra.mxu0 0.0
    %329 = vmatprep.subr.mxu0 0.0
    %330 = vmatpush1.msra.mxu0 0.0
    %331 = vmatprep.subr.mxu0 0.0
    %332 = vmatpush1.msra.mxu0 0.0
    %333 = vmatprep.subr.mxu0 0.0
    %334 = vmatpush1.msra.mxu0 0.0
    %335 = vmatprep.subr.mxu0 0.0
    %336 = vmatpush1.msra.mxu0 0.0
    %337 = vmatprep.subr.mxu0 0.0
    %338 = vmatpush1.msra.mxu0 %v295
    %339 = vmatprep.subr.mxu0 0.0
    %340 = vmatpush1.msra.mxu0 %v294
    %341 = vmatprep.subr.mxu0 0.0
    %342 = vmatpush1.msra.mxu0 %v293
    %343 = vmatprep.subr.mxu0 0.0
    %344 = vmatpush1.msra.mxu0 %v292
    %345 = vmatprep.subr.mxu0 0.0
    %346 = vmatpush2.msra.mxu0 0.0
    %347 = vmatprep.subr.mxu0 0.0
    %348 = vmatpush2.msra.mxu0 0.0
    %349 = vmatprep.subr.mxu0 0.0
    %350 = vmatpush2.msra.mxu0 0.0
    %351 = vmatprep.subr.mxu0 0.0
    %352 = vmatpush2.msra.mxu0 0.0
    %353 = vmatprep.subr.mxu0 0.0
    %354 = vmatpush2.msra.mxu0 0.0
    %355 = vmatprep.subr.mxu0 0.0
    %356 = vmatpush2.msra.mxu0 0.0
    %357 = vmatprep.subr.mxu0 0.0
    %358 = vmatpush2.msra.mxu0 0.0
    %359 = vmatprep.subr.mxu0 0.0
    %360 = vmatpush2.msra.mxu0 0.0
    %361 = vmatprep.subr.mxu0 0.0
    %362 = vmatpush2.msra.mxu0 0.0
    %363 = vmatprep.subr.mxu0 0.0
    %364 = vmatpush2.msra.mxu0 0.0
    %365 = vmatprep.subr.mxu0 0.0
    %366 = vmatpush2.msra.mxu0 0.0
    %367 = vmatprep.subr.mxu0 0.0
    %368 = vmatpush2.msra.mxu0 0.0
    %369 = vmatprep.subr.mxu0 0.0
    %370 = vmatpush2.msra.mxu0 0.0
    %371 = vmatprep.subr.mxu0 0.0
    %372 = vmatpush2.msra.mxu0 0.0
    %373 = vmatprep.subr.mxu0 0.0
    %374 = vmatpush2.msra.mxu0 0.0
    %375 = vmatprep.subr.mxu0 0.0
    %376 = vmatpush2.msra.mxu0 0.0
    %377 = vmatprep.mubr.f32.mxu0 0.0
    %378 = vmatmul.mubr.f32.gmra.mxu0 %v305
    %v379 = vpop.f32.mrf.mxu0
    %v380 = vadd.f32 %v302, %v379
    %v381 = vpop.f32.mrf.mxu0
    %382 = vmatprep.mubr.f32.mxu0 0.0
    %383 = vmatmul.mubr.f32.gmra.mxu0 %v308
    %v384 = vpop.f32.mrf.mxu0
    %v385 = vadd.f32 %v302, %v384
    %v386 = vpop.f32.mrf.mxu0
    %387 = vmatprep.mubr.f32.mxu0 0.0
    %388 = vmatmul.mubr.f32.gmra.mxu0 %v311
    %v389 = vpop.f32.mrf.mxu0
    %v390 = vadd.f32 %v302, %v389
    %v391 = vpop.f32.mrf.mxu0
    %392 = vdwg.mxu0
    %v393 = vmax.f32 %v380, 0.0
    %v394 = vmax.f32 %v385, 0.0
    %v395 = vmax.f32 %v390, 0.0
    %s396 = scalar_lea.vmem [#allocation7], 96
    %v397 = vld [vmem:[%s396] sm:$0xff]
    %v398 = vld [vmem:[%s396 + $0x8] sm:$0xff]
    %v399 = vld [vmem:[%s396 + $0x10] sm:$0xff]
    %v400 = vld [vmem:[%s396 + $0x18] sm:$0xff]
    %s401 = scalar_lea.vmem [#allocation8], 3
    %v402 = vld [vmem:[%s401] sm:$0x1]
    %v404 = vlaneseq
    %v405 = vshrl.u32 %v404, 7
    %v406 = vsub.s32 0, %v405
    %v407 = vrot.slane %v402, %v406
    %v410 = vsel %vm93, %v393, 0
    %v413 = vsel %vm93, %v394, 0
    %v416 = vsel %vm93, %v395, 0
    %418 = vmatprep.subr.mxu0 0.0
    %419 = vmatpush1.msra.mxu0 0.0
    %420 = vmatprep.subr.mxu0 0.0
    %421 = vmatpush1.msra.mxu0 0.0
    %422 = vmatprep.subr.mxu0 0.0
    %423 = vmatpush1.msra.mxu0 0.0
    %424 = vmatprep.subr.mxu0 0.0
    %425 = vmatpush1.msra.mxu0 0.0
    %426 = vmatprep.subr.mxu0 0.0
    %427 = vmatpush1.msra.mxu0 0.0
    %428 = vmatprep.subr.mxu0 0.0
    %429 = vmatpush1.msra.mxu0 0.0
    %430 = vmatprep.subr.mxu0 0.0
    %431 = vmatpush1.msra.mxu0 0.0
    %432 = vmatprep.subr.mxu0 0.0
    %433 = vmatpush1.msra.mxu0 0.0
    %434 = vmatprep.subr.mxu0 0.0
    %435 = vmatpush1.msra.mxu0 0.0
    %436 = vmatprep.subr.mxu0 0.0
    %437 = vmatpush1.msra.mxu0 0.0
    %438 = vmatprep.subr.mxu0 0.0
    %439 = vmatpush1.msra.mxu0 0.0
    %440 = vmatprep.subr.mxu0 0.0
    %441 = vmatpush1.msra.mxu0 0.0
    %442 = vmatprep.subr.mxu0 0.0
    %443 = vmatpush1.msra.mxu0 %v400
    %444 = vmatprep.subr.mxu0 0.0
    %445 = vmatpush1.msra.mxu0 %v399
    %446 = vmatprep.subr.mxu0 0.0
    %447 = vmatpush1.msra.mxu0 %v398
    %448 = vmatprep.subr.mxu0 0.0
    %449 = vmatpush1.msra.mxu0 %v397
    %450 = vmatprep.subr.mxu0 0.0
    %451 = vmatpush2.msra.mxu0 0.0
    %452 = vmatprep.subr.mxu0 0.0
    %453 = vmatpush2.msra.mxu0 0.0
    %454 = vmatprep.subr.mxu0 0.0
    %455 = vmatpush2.msra.mxu0 0.0
    %456 = vmatprep.subr.mxu0 0.0
    %457 = vmatpush2.msra.mxu0 0.0
    %458 = vmatprep.subr.mxu0 0.0
    %459 = vmatpush2.msra.mxu0 0.0
    %460 = vmatprep.subr.mxu0 0.0
    %461 = vmatpush2.msra.mxu0 0.0
    %462 = vmatprep.subr.mxu0 0.0
    %463 = vmatpush2.msra.mxu0 0.0
    %464 = vmatprep.subr.mxu0 0.0
    %465 = vmatpush2.msra.mxu0 0.0
    %466 = vmatprep.subr.mxu0 0.0
    %467 = vmatpush2.msra.mxu0 0.0
    %468 = vmatprep.subr.mxu0 0.0
    %469 = vmatpush2.msra.mxu0 0.0
    %470 = vmatprep.subr.mxu0 0.0
    %471 = vmatpush2.msra.mxu0 0.0
    %472 = vmatprep.subr.mxu0 0.0
    %473 = vmatpush2.msra.mxu0 0.0
    %474 = vmatprep.subr.mxu0 0.0
    %475 = vmatpush2.msra.mxu0 0.0
    %476 = vmatprep.subr.mxu0 0.0
    %477 = vmatpush2.msra.mxu0 0.0
    %478 = vmatprep.subr.mxu0 0.0
    %479 = vmatpush2.msra.mxu0 0.0
    %480 = vmatprep.subr.mxu0 0.0
    %481 = vmatpush2.msra.mxu0 0.0
    %482 = vmatprep.mubr.f32.mxu0 0.0
    %483 = vmatmul.mubr.f32.gmra.mxu0 %v410
    %v484 = vpop.f32.mrf.mxu0
    %v485 = vadd.f32 %v407, %v484
    %v486 = vpop.f32.mrf.mxu0
    %487 = vmatprep.mubr.f32.mxu0 0.0
    %488 = vmatmul.mubr.f32.gmra.mxu0 %v413
    %v489 = vpop.f32.mrf.mxu0
    %v490 = vadd.f32 %v407, %v489
    %v491 = vpop.f32.mrf.mxu0
    %492 = vmatprep.mubr.f32.mxu0 0.0
    %493 = vmatmul.mubr.f32.gmra.mxu0 %v416
    %v494 = vpop.f32.mrf.mxu0
    %v495 = vadd.f32 %v407, %v494
    %v496 = vpop.f32.mrf.mxu0
    %497 = vdwg.mxu0
    %v498 = vmax.f32 %v485, 0.0
    %v499 = vmax.f32 %v490, 0.0
    %v500 = vmax.f32 %v495, 0.0
    %v501 = vadd.f32 %v498, %v288
    %v502 = vadd.f32 %v499, %v289
    %v503 = vadd.f32 %v500, %v290
    %s504 = scalar_lea.vmem [#allocation7], 128
    %v505 = vld [vmem:[%s504] sm:$0xff]
    %v506 = vld [vmem:[%s504 + $0x8] sm:$0xff]
    %v507 = vld [vmem:[%s504 + $0x10] sm:$0xff]
    %v508 = vld [vmem:[%s504 + $0x18] sm:$0xff]
    %s509 = scalar_lea.vmem [#allocation8], 4
    %v510 = vld [vmem:[%s509] sm:$0x1]
    %v512 = vlaneseq
    %v513 = vshrl.u32 %v512, 7
    %v514 = vsub.s32 0, %v513
    %v515 = vrot.slane %v510, %v514
    %v518 = vsel %vm93, %v501, 0
    %v521 = vsel %vm93, %v502, 0
    %v524 = vsel %vm93, %v503, 0
    %526 = vmatprep.subr.mxu0 0.0
    %527 = vmatpush1.msra.mxu0 0.0
    %528 = vmatprep.subr.mxu0 0.0
    %529 = vmatpush1.msra.mxu0 0.0
    %530 = vmatprep.subr.mxu0 0.0
    %531 = vmatpush1.msra.mxu0 0.0
    %532 = vmatprep.subr.mxu0 0.0
    %533 = vmatpush1.msra.mxu0 0.0
    %534 = vmatprep.subr.mxu0 0.0
    %535 = vmatpush1.msra.mxu0 0.0
    %536 = vmatprep.subr.mxu0 0.0
    %537 = vmatpush1.msra.mxu0 0.0
    %538 = vmatprep.subr.mxu0 0.0
    %539 = vmatpush1.msra.mxu0 0.0
    %540 = vmatprep.subr.mxu0 0.0
    %541 = vmatpush1.msra.mxu0 0.0
    %542 = vmatprep.subr.mxu0 0.0
    %543 = vmatpush1.msra.mxu0 0.0
    %544 = vmatprep.subr.mxu0 0.0
    %545 = vmatpush1.msra.mxu0 0.0
    %546 = vmatprep.subr.mxu0 0.0
    %547 = vmatpush1.msra.mxu0 0.0
    %548 = vmatprep.subr.mxu0 0.0
    %549 = vmatpush1.msra.mxu0 0.0
    %550 = vmatprep.subr.mxu0 0.0
    %551 = vmatpush1.msra.mxu0 %v508
    %552 = vmatprep.subr.mxu0 0.0
    %553 = vmatpush1.msra.mxu0 %v507
    %554 = vmatprep.subr.mxu0 0.0
    %555 = vmatpush1.msra.mxu0 %v506
    %556 = vmatprep.subr.mxu0 0.0
    %557 = vmatpush1.msra.mxu0 %v505
    %558 = vmatprep.subr.mxu0 0.0
    %559 = vmatpush2.msra.mxu0 0.0
    %560 = vmatprep.subr.mxu0 0.0
    %561 = vmatpush2.msra.mxu0 0.0
    %562 = vmatprep.subr.mxu0 0.0
    %563 = vmatpush2.msra.mxu0 0.0
    %564 = vmatprep.subr.mxu0 0.0
    %565 = vmatpush2.msra.mxu0 0.0
    %566 = vmatprep.subr.mxu0 0.0
    %567 = vmatpush2.msra.mxu0 0.0
    %568 = vmatprep.subr.mxu0 0.0
    %569 = vmatpush2.msra.mxu0 0.0
    %570 = vmatprep.subr.mxu0 0.0
    %571 = vmatpush2.msra.mxu0 0.0
    %572 = vmatprep.subr.mxu0 0.0
    %573 = vmatpush2.msra.mxu0 0.0
    %574 = vmatprep.subr.mxu0 0.0
    %575 = vmatpush2.msra.mxu0 0.0
    %576 = vmatprep.subr.mxu0 0.0
    %577 = vmatpush2.msra.mxu0 0.0
    %578 = vmatprep.subr.mxu0 0.0
    %579 = vmatpush2.msra.mxu0 0.0
    %580 = vmatprep.subr.mxu0 0.0
    %581 = vmatpush2.msra.mxu0 0.0
    %582 = vmatprep.subr.mxu0 0.0
    %583 = vmatpush2.msra.mxu0 0.0
    %584 = vmatprep.subr.mxu0 0.0
    %585 = vmatpush2.msra.mxu0 0.0
    %586 = vmatprep.subr.mxu0 0.0
    %587 = vmatpush2.msra.mxu0 0.0
    %588 = vmatprep.subr.mxu0 0.0
    %589 = vmatpush2.msra.mxu0 0.0
    %590 = vmatprep.mubr.f32.mxu0 0.0
    %591 = vmatmul.mubr.f32.gmra.mxu0 %v518
    %v592 = vpop.f32.mrf.mxu0
    %v593 = vadd.f32 %v515, %v592
    %v594 = vpop.f32.mrf.mxu0
    %595 = vmatprep.mubr.f32.mxu0 0.0
    %596 = vmatmul.mubr.f32.gmra.mxu0 %v521
    %v597 = vpop.f32.mrf.mxu0
    %v598 = vadd.f32 %v515, %v597
    %v599 = vpop.f32.mrf.mxu0
    %600 = vmatprep.mubr.f32.mxu0 0.0
    %601 = vmatmul.mubr.f32.gmra.mxu0 %v524
    %v602 = vpop.f32.mrf.mxu0
    %v603 = vadd.f32 %v515, %v602
    %v604 = vpop.f32.mrf.mxu0
    %605 = vdwg.mxu0
    %v606 = vmax.f32 %v593, 0.0
    %v607 = vmax.f32 %v598, 0.0
    %v608 = vmax.f32 %v603, 0.0
    %v609 = vadd.f32 %v606, %v183
    %v610 = vadd.f32 %v607, %v184
    %v611 = vadd.f32 %v608, %v185
    %s612 = scalar_lea.vmem [#allocation7], 160
    %v613 = vld [vmem:[%s612] sm:$0xff]
    %v614 = vld [vmem:[%s612 + $0x8] sm:$0xff]
    %v615 = vld [vmem:[%s612 + $0x10] sm:$0xff]
    %v616 = vld [vmem:[%s612 + $0x18] sm:$0xff]
    %s617 = scalar_lea.vmem [#allocation8], 5
    %v618 = vld [vmem:[%s617] sm:$0x1]
    %v620 = vlaneseq
    %v621 = vshrl.u32 %v620, 7
    %v622 = vsub.s32 0, %v621
    %v623 = vrot.slane %v618, %v622
    %v626 = vsel %vm93, %v609, 0
    %v629 = vsel %vm93, %v610, 0
    %v632 = vsel %vm93, %v611, 0
    %634 = vmatprep.subr.mxu0 0.0
    %635 = vmatpush1.msra.mxu0 0.0
    %636 = vmatprep.subr.mxu0 0.0
    %637 = vmatpush1.msra.mxu0 0.0
    %638 = vmatprep.subr.mxu0 0.0
    %639 = vmatpush1.msra.mxu0 0.0
    %640 = vmatprep.subr.mxu0 0.0
    %641 = vmatpush1.msra.mxu0 0.0
    %642 = vmatprep.subr.mxu0 0.0
    %643 = vmatpush1.msra.mxu0 0.0
    %644 = vmatprep.subr.mxu0 0.0
    %645 = vmatpush1.msra.mxu0 0.0
    %646 = vmatprep.subr.mxu0 0.0
    %647 = vmatpush1.msra.mxu0 0.0
    %648 = vmatprep.subr.mxu0 0.0
    %649 = vmatpush1.msra.mxu0 0.0
    %650 = vmatprep.subr.mxu0 0.0
    %651 = vmatpush1.msra.mxu0 0.0
    %652 = vmatprep.subr.mxu0 0.0
    %653 = vmatpush1.msra.mxu0 0.0
    %654 = vmatprep.subr.mxu0 0.0
    %655 = vmatpush1.msra.mxu0 0.0
    %656 = vmatprep.subr.mxu0 0.0
    %657 = vmatpush1.msra.mxu0 0.0
    %658 = vmatprep.subr.mxu0 0.0
    %659 = vmatpush1.msra.mxu0 %v616
    %660 = vmatprep.subr.mxu0 0.0
    %661 = vmatpush1.msra.mxu0 %v615
    %662 = vmatprep.subr.mxu0 0.0
    %663 = vmatpush1.msra.mxu0 %v614
    %664 = vmatprep.subr.mxu0 0.0
    %665 = vmatpush1.msra.mxu0 %v613
    %666 = vmatprep.subr.mxu0 0.0
    %667 = vmatpush2.msra.mxu0 0.0
    %668 = vmatprep.subr.mxu0 0.0
    %669 = vmatpush2.msra.mxu0 0.0
    %670 = vmatprep.subr.mxu0 0.0
    %671 = vmatpush2.msra.mxu0 0.0
    %672 = vmatprep.subr.mxu0 0.0
    %673 = vmatpush2.msra.mxu0 0.0
    %674 = vmatprep.subr.mxu0 0.0
    %675 = vmatpush2.msra.mxu0 0.0
    %676 = vmatprep.subr.mxu0 0.0
    %677 = vmatpush2.msra.mxu0 0.0
    %678 = vmatprep.subr.mxu0 0.0
    %679 = vmatpush2.msra.mxu0 0.0
    %680 = vmatprep.subr.mxu0 0.0
    %681 = vmatpush2.msra.mxu0 0.0
    %682 = vmatprep.subr.mxu0 0.0
    %683 = vmatpush2.msra.mxu0 0.0
    %684 = vmatprep.subr.mxu0 0.0
    %685 = vmatpush2.msra.mxu0 0.0
    %686 = vmatprep.subr.mxu0 0.0
    %687 = vmatpush2.msra.mxu0 0.0
    %688 = vmatprep.subr.mxu0 0.0
    %689 = vmatpush2.msra.mxu0 0.0
    %690 = vmatprep.subr.mxu0 0.0
    %691 = vmatpush2.msra.mxu0 0.0
    %692 = vmatprep.subr.mxu0 0.0
    %693 = vmatpush2.msra.mxu0 0.0
    %694 = vmatprep.subr.mxu0 0.0
    %695 = vmatpush2.msra.mxu0 0.0
    %696 = vmatprep.subr.mxu0 0.0
    %697 = vmatpush2.msra.mxu0 0.0
    %698 = vmatprep.mubr.f32.mxu0 0.0
    %699 = vmatmul.mubr.f32.gmra.mxu0 %v626
    %v700 = vpop.f32.mrf.mxu0
    %v701 = vadd.f32 %v623, %v700
    %v702 = vpop.f32.mrf.mxu0
    %703 = vmatprep.mubr.f32.mxu0 0.0
    %704 = vmatmul.mubr.f32.gmra.mxu0 %v629
    %v705 = vpop.f32.mrf.mxu0
    %v706 = vadd.f32 %v623, %v705
    %v707 = vpop.f32.mrf.mxu0
    %708 = vmatprep.mubr.f32.mxu0 0.0
    %709 = vmatmul.mubr.f32.gmra.mxu0 %v632
    %v710 = vpop.f32.mrf.mxu0
    %v711 = vadd.f32 %v623, %v710
    %v712 = vpop.f32.mrf.mxu0
    %713 = vdwg.mxu0
    %v714 = vmax.f32 %v701, 0.0
    %v715 = vmax.f32 %v706, 0.0
    %v716 = vmax.f32 %v711, 0.0
    %s717 = scalar_lea.vmem [#allocation7], 192
    %v718 = vld [vmem:[%s717] sm:$0xff]
    %v719 = vld [vmem:[%s717 + $0x8] sm:$0xff]
    %v720 = vld [vmem:[%s717 + $0x10] sm:$0xff]
    %v721 = vld [vmem:[%s717 + $0x18] sm:$0xff]
    %s722 = scalar_lea.vmem [#allocation8], 6
    %v723 = vld [vmem:[%s722] sm:$0x1]
    %v725 = vlaneseq
    %v726 = vshrl.u32 %v725, 7
    %v727 = vsub.s32 0, %v726
    %v728 = vrot.slane %v723, %v727
    %v731 = vsel %vm93, %v714, 0
    %v734 = vsel %vm93, %v715, 0
    %v737 = vsel %vm93, %v716, 0
    %739 = vmatprep.subr.mxu0 0.0
    %740 = vmatpush1.msra.mxu0 0.0
    %741 = vmatprep.subr.mxu0 0.0
    %742 = vmatpush1.msra.mxu0 0.0
    %743 = vmatprep.subr.mxu0 0.0
    %744 = vmatpush1.msra.mxu0 0.0
    %745 = vmatprep.subr.mxu0 0.0
    %746 = vmatpush1.msra.mxu0 0.0
    %747 = vmatprep.subr.mxu0 0.0
    %748 = vmatpush1.msra.mxu0 0.0
    %749 = vmatprep.subr.mxu0 0.0
    %750 = vmatpush1.msra.mxu0 0.0
    %751 = vmatprep.subr.mxu0 0.0
    %752 = vmatpush1.msra.mxu0 0.0
    %753 = vmatprep.subr.mxu0 0.0
    %754 = vmatpush1.msra.mxu0 0.0
    %755 = vmatprep.subr.mxu0 0.0
    %756 = vmatpush1.msra.mxu0 0.0
    %757 = vmatprep.subr.mxu0 0.0
    %758 = vmatpush1.msra.mxu0 0.0
    %759 = vmatprep.subr.mxu0 0.0
    %760 = vmatpush1.msra.mxu0 0.0
    %761 = vmatprep.subr.mxu0 0.0
    %762 = vmatpush1.msra.mxu0 0.0
    %763 = vmatprep.subr.mxu0 0.0
    %764 = vmatpush1.msra.mxu0 %v721
    %765 = vmatprep.subr.mxu0 0.0
    %766 = vmatpush1.msra.mxu0 %v720
    %767 = vmatprep.subr.mxu0 0.0
    %768 = vmatpush1.msra.mxu0 %v719
    %769 = vmatprep.subr.mxu0 0.0
    %770 = vmatpush1.msra.mxu0 %v718
    %771 = vmatprep.subr.mxu0 0.0
    %772 = vmatpush2.msra.mxu0 0.0
    %773 = vmatprep.subr.mxu0 0.0
    %774 = vmatpush2.msra.mxu0 0.0
    %775 = vmatprep.subr.mxu0 0.0
    %776 = vmatpush2.msra.mxu0 0.0
    %777 = vmatprep.subr.mxu0 0.0
    %778 = vmatpush2.msra.mxu0 0.0
    %779 = vmatprep.subr.mxu0 0.0
    %780 = vmatpush2.msra.mxu0 0.0
    %781 = vmatprep.subr.mxu0 0.0
    %782 = vmatpush2.msra.mxu0 0.0
    %783 = vmatprep.subr.mxu0 0.0
    %784 = vmatpush2.msra.mxu0 0.0
    %785 = vmatprep.subr.mxu0 0.0
    %786 = vmatpush2.msra.mxu0 0.0
    %787 = vmatprep.subr.mxu0 0.0
    %788 = vmatpush2.msra.mxu0 0.0
    %789 = vmatprep.subr.mxu0 0.0
    %790 = vmatpush2.msra.mxu0 0.0
    %791 = vmatprep.subr.mxu0 0.0
    %792 = vmatpush2.msra.mxu0 0.0
    %793 = vmatprep.subr.mxu0 0.0
    %794 = vmatpush2.msra.mxu0 0.0
    %795 = vmatprep.subr.mxu0 0.0
    %796 = vmatpush2.msra.mxu0 0.0
    %797 = vmatprep.subr.mxu0 0.0
    %798 = vmatpush2.msra.mxu0 0.0
    %799 = vmatprep.subr.mxu0 0.0
    %800 = vmatpush2.msra.mxu0 0.0
    %801 = vmatprep.subr.mxu0 0.0
    %802 = vmatpush2.msra.mxu0 0.0
    %803 = vmatprep.mubr.f32.mxu0 0.0
    %804 = vmatmul.mubr.f32.gmra.mxu0 %v731
    %v805 = vpop.f32.mrf.mxu0
    %v806 = vadd.f32 %v728, %v805
    %v807 = vpop.f32.mrf.mxu0
    %808 = vmatprep.mubr.f32.mxu0 0.0
    %809 = vmatmul.mubr.f32.gmra.mxu0 %v734
    %v810 = vpop.f32.mrf.mxu0
    %v811 = vadd.f32 %v728, %v810
    %v812 = vpop.f32.mrf.mxu0
    %813 = vmatprep.mubr.f32.mxu0 0.0
    %814 = vmatmul.mubr.f32.gmra.mxu0 %v737
    %v815 = vpop.f32.mrf.mxu0
    %v816 = vadd.f32 %v728, %v815
    %v817 = vpop.f32.mrf.mxu0
    %818 = vdwg.mxu0
    %819 = vst.msk [vmem:[#allocation10] sm:$0xff] %vm93, %v806
    %820 = vst.msk [vmem:[#allocation10 + $0x8] sm:$0xff] %vm93, %v811
    %821 = vst.msk [vmem:[#allocation10 + $0x10] sm:$0xff] %vm93, %v816
    // Predicated region
    $region34: #{tpu_custom_call.1} parent=1 // pred_check
      _
    $region35: #{tpu_custom_call.1} parent=1 // pred_check_branch
      %823 = sbr.rel (0) target = $region37
    $region36: #{tpu_custom_call.1} parent=1 // pred_region
      %s825 = ssub.s32 384, 384
      %826 = vsyncadd [#allocation4], %s825
      %s827 = sshll.u32 [#allocation10], 4
      %s828 = int_to_ptr.vmem [resolvable:$true] %s827
      %833 = dma.vmem_to_hbm [thread:$0]  %s828, 384, %s4, [#allocation4], 128, 128, 8
    $region37: #{tpu_custom_call.1} parent=1 // pred_fallthru
      _
    // Predicated region
    $region38: #{tpu_custom_call.1} parent=1 // pred_check
      _
    $region39: #{tpu_custom_call.1} parent=1 // pred_check_branch
      %835 = sbr.rel (0) target = $region41
    $region40: #{tpu_custom_call.1} parent=1 // pred_region
      %836 = dma.done [#allocation4], 384
    $region41: #{tpu_custom_call.1} parent=1 // pred_fallthru
      _
    %837 = vsyncpa [#allocation3], 1
    %838 = vsyncpa [#allocation6], 1
    %839 = vsyncpa [#allocation9], 1
    %840 = vsyncpa [#allocation4], 1

</llo_original>
